<compile_context>
chip_gen: v6e
topology: v6e:2x2x1
jax: 0.10.0
libtpu: 0.0.40
codegen_flags: <defaults>
</compile_context>

<pallas_src>
import functools

import jax
import jax.numpy as jnp
from jax.experimental import pallas as pl
from jax.experimental.pallas import tpu as pltpu

_BIG = 1e30  # additive-mask magnitude; kept in f32 everywhere (never cast to bf16)


def _round_up(x, m):
    return ((x + m - 1) // m) * m


def _pad_axis(x, axis, target):
    pad = target - x.shape[axis]
    if pad == 0:
        return x
    widths = [(0, 0)] * x.ndim
    widths[axis] = (0, pad)
    return jnp.pad(x, widths)


# ----------------------------------------------------------------------------
# Kernel 1: fused r-drop LAAT decoder (both passes in one launch).
#   s[b,t,l]    = hidden[b,t,:] . label_feats[l,:]
#   attn        = masked softmax over t
#   logits[b,l] = sum_t attn[b,t,l] * s[b,t,l] + bias[l]
# grid = (B, Lp/l_tile, Tp/t_tile); T innermost "arbitrary" reduction.
# TODO(synk): create_decoder()'s exact architecture is not given; LAAT label
#             attention is used as the decoder hot path.
# ----------------------------------------------------------------------------
def _laat_rdrop_kernel(h0_ref, h1_ref, mask_ref, lfT_ref, bias_ref,
                       out0_ref, out1_ref, m_sc, den_sc, num_sc, *, t_tile):
    t = pl.program_id(2)

    @pl.when(t == 0)
    def _():
        m_sc[...] = jnp.full_like(m_sc, -_BIG)
        den_sc[...] = jnp.zeros_like(den_sc)
        num_sc[...] = jnp.zeros_like(num_sc)

    lfT = lfT_ref[...]                                   # [H, Lt] bf16 (lane-dense RHS)
    t0 = pl.multiple_of(t * t_tile, t_tile)
    m_add = mask_ref[0, pl.ds(t0, t_tile), :]            # [Tt, 1] f32 additive mask

    def _update(h, slot):
        # canonical [Tt,H] @ [H,Lt] on the MXU, f32 accumulation.
        s = jnp.dot(h, lfT, preferred_element_type=jnp.float32)   # [Tt, Lt]
        s_m = s + m_add                                  # masked tokens -> ~ -1e30
        m_old = m_sc[slot:slot + 1, :]                   # [1, Lt]
        m_new = jnp.maximum(m_old, jnp.max(s_m, axis=0, keepdims=True))
        scale = jnp.exp(m_old - m_new)
        e = jnp.exp(s_m - m_new)                         # exactly 0 for masked tokens
        den_sc[slot:slot + 1, :] = (scale * den_sc[slot:slot + 1, :]
                                    + jnp.sum(e, axis=0, keepdims=True))
        num_sc[slot:slot + 1, :] = (scale * num_sc[slot:slot + 1, :]
                                    + jnp.sum(e * s, axis=0, keepdims=True))
        m_sc[slot:slot + 1, :] = m_new

    _update(h0_ref[0], 0)        # r-drop pass 0
    _update(h1_ref[0], 1)        # r-drop pass 1 (same lf tile, amortized)

    @pl.when(t == pl.num_programs(2) - 1)
    def _():
        inv = pl.reciprocal(den_sc[...] + 1e-9, approx=True)       # EUP slot
        logits = num_sc[...] * inv + bias_ref[...]                 # [2, Lt]
        out0_ref[0] = logits[0:1, :].astype(out0_ref.dtype)
        out1_ref[0] = logits[1:2, :].astype(out1_ref.dtype)


def laat_decoder_rdrop(hidden0, hidden1, mask_add, lfT, bias, *,
                       t_tile, l_tile, vmem_limit_bytes=None):
    """Fused two-pass LAAT decoder. Inputs are already padded/tile-aligned."""
    B, Tp, H = hidden0.shape
    Lp = lfT.shape[1]
    assert Tp % t_tile == 0 and Lp % l_tile == 0

    grid = (B, Lp // l_tile, Tp // t_tile)   # (parallel, parallel, reduction)
    kern = functools.partial(_laat_rdrop_kernel, t_tile=t_tile)
    out0, out1 = pl.pallas_call(
        kern,
        grid=grid,
        in_specs=[
            pl.BlockSpec((1, t_tile, H), lambda b, l, t: (b, t, 0)),   # hidden0
            pl.BlockSpec((1, t_tile, H), lambda b, l, t: (b, t, 0)),   # hidden1
            pl.BlockSpec((1, Tp, 1), lambda b, l, t: (b, 0, 0)),       # mask row (resident per b)
            pl.BlockSpec((H, l_tile), lambda b, l, t: (0, l)),         # pre-transposed label feats
            pl.BlockSpec((1, l_tile), lambda b, l, t: (0, l)),         # bias
        ],
        out_specs=(
            pl.BlockSpec((1, 1, l_tile), lambda b, l, t: (b, 0, l)),
            pl.BlockSpec((1, 1, l_tile), lambda b, l, t: (b, 0, l)),
        ),
        out_shape=(jax.ShapeDtypeStruct((B, 1, Lp), jnp.float32),
                   jax.ShapeDtypeStruct((B, 1, Lp), jnp.float32)),
        scratch_shapes=[pltpu.VMEM((2, l_tile), jnp.float32)] * 3,      # m / den / num (per pass)
        compiler_params=pltpu.CompilerParams(
            dimension_semantics=("parallel", "parallel", "arbitrary"),
            vmem_limit_bytes=vmem_limit_bytes),
    )(hidden0, hidden1, mask_add, lfT, bias)
    return out0[:, 0, :], out1[:, 0, :]


# ----------------------------------------------------------------------------
# Kernel 2: fused, row-tiled loss epilogue — one launch computes
#   bce0 = BCEWithLogits(logits0, labels).mean()      (stand-in for loss_fn)
#   bce1 = BCEWithLogits(logits1, labels).mean()
#   kl   = compute_kl_loss / compute_kl_loss_v2 (require_activation=True,
#          per-row sum / label_avg_num, mean over batch, symmetric /2)
# TODO(synk): loss_fn is not defined in the reference source; BCE-with-logits
#             is the standard ICD-coding code loss and is used here.
# ----------------------------------------------------------------------------
def _fused_loss_kernel(p_ref, q_ref, y_ref, bce0_ref, bce1_ref, kl_ref, *,
                       kl_type, inv_n, kl_scale):
    i = pl.program_id(0)

    @pl.when(i == 0)
    def _():
        bce0_ref[...] = jnp.zeros_like(bce0_ref)
        bce1_ref[...] = jnp.zeros_like(bce1_ref)
        kl_ref[...] = jnp.zeros_like(kl_ref)

    p = p_ref[...].astype(jnp.float32)     # [bt, L]
    q = q_ref[...].astype(jnp.float32)
    y = y_ref[...].astype(jnp.float32)

    def _bce_sum(x):
        elem = jnp.maximum(x, 0.0) - x * y + jnp.log1p(jnp.exp(-jnp.abs(x)))
        return jnp.sum(elem, axis=(0, 1), keepdims=True)

    bce0_ref[...] += _bce_sum(p)
    bce1_ref[...] += _bce_sum(q)

    if kl_type == "softmax":               # compute_kl_loss
        log_p = jax.nn.log_softmax(p, axis=-1)
        log_q = jax.nn.log_softmax(q, axis=-1)
        act_p = jnp.exp(log_p)
        act_q = jnp.exp(log_q)
    else:                                  # compute_kl_loss_v2 (sigmoid)
        log_p = jax.nn.log_sigmoid(p)
        log_q = jax.nn.log_sigmoid(q)
        act_p = jax.nn.sigmoid(p)
        act_q = jax.nn.sigmoid(q)

    # F.kl_div(log_p, act_q,'none') + F.kl_div(log_q, act_p,'none'), summed
    kl_elem = act_q * (log_q - log_p) + act_p * (log_p - log_q)
    kl_ref[...] += jnp.sum(kl_elem, axis=(0, 1), keepdims=True)

    @pl.when(i == pl.num_programs(0) - 1)
    def _():
        bce0_ref[...] *= inv_n
        bce1_ref[...] *= inv_n
        kl_ref[...] *= kl_scale


def fused_losses(logits0, logits1, labels, *, kl_type="softmax",
                 label_avg_num=8.0):
    B, L = logits0.shape
    b_tile = 8 if (B % 8 == 0) else B        # row-tile when batch allows it
    nb = B // b_tile
    kern = functools.partial(
        _fused_loss_kernel, kl_type=kl_type,
        inv_n=1.0 / float(B * L),
        kl_scale=1.0 / (2.0 * float(label_avg_num) * float(B)))
    row = pl.BlockSpec((b_tile, L), lambda i: (i, 0))
    scalar = pl.BlockSpec((1, 1), lambda i: (0, 0))
    sd = jax.ShapeDtypeStruct((1, 1), jnp.float32)
    bce0, bce1, kl = pl.pallas_call(
        kern,
        grid=(nb,),
        in_specs=[row, row, row],
        out_specs=(scalar, scalar, scalar),
        out_shape=(sd, sd, sd),
        compiler_params=pltpu.CompilerParams(dimension_semantics=("arbitrary",)),
    )(logits0.astype(jnp.float32), logits1.astype(jnp.float32),
      labels.astype(jnp.float32))
    return bce0[0, 0], bce1[0, 0], kl[0, 0]


# ----------------------------------------------------------------------------
# Plain-JAX glue: encoder + IcdModel.forward_rdrop (topk_num <= 0, use_graph=False)
# ----------------------------------------------------------------------------
def _text_encoder(params, input_word, word_mask, *, dropout_rate=0.0, rng=None,
                  out_dtype=jnp.bfloat16):
    # TODO(synk): TextEncoder / LabelEncoder architectures are not provided;
    #             embedding + linear + tanh (with dropout for r-drop) is used.
    emb = params["emb"][input_word]                           # [B, T, H]
    hidden = jnp.tanh(emb @ params["W_enc"] + params["b_enc"])
    if dropout_rate > 0.0 and rng is not None:
        keep = jax.random.bernoulli(rng, 1.0 - dropout_rate, hidden.shape)
        hidden = jnp.where(keep, hidden / (1.0 - dropout_rate), 0.0)
    # emit the MXU operand dtype directly (no extra astype/pad HBM pass later)
    return (hidden * word_mask[:, :, None]).astype(out_dtype)


def icd_forward_rdrop(params, input_word, word_mask, labels, loss_config, *,
                      kl_type="softmax", avg_label_num=8.0, dropout_rate=0.1,
                      rng=None, t_tile=256, l_tile=1024, vmem_limit_bytes=None):
    if rng is None:
        rng = jax.random.PRNGKey(0)
    k0, k1 = jax.random.split(rng)

    B, T = input_word.shape
    L, H = params["label_feats"].shape

    # effective tiles: sublane-friendly T tiles (mult of 16 for bf16), lane-dense L tiles
    t_tile = _round_up(max(16, min(t_tile, _round_up(T, 16))), 16)
    l_tile = _round_up(max(128, min(l_tile, _round_up(L, 128))), 128)
    Tp = _round_up(T, t_tile)
    Lp = _round_up(L, l_tile)

    # pad only the cheap [B, T] inputs once; the encoder emits hidden already
    # padded & in bf16 (padded tokens are masked out by the additive mask).
    input_word_p = _pad_axis(input_word, 1, Tp)
    word_mask_p = _pad_axis(word_mask.astype(jnp.float32), 1, Tp)

    # r-drop: two stochastic encoder passes
    hidden0 = _text_encoder(params, input_word_p, word_mask_p,
                            dropout_rate=dropout_rate, rng=k0)
    hidden1 = _text_encoder(params, input_word_p, word_mask_p,
                            dropout_rate=dropout_rate, rng=k1)

    # additive mask: 0 where valid, -1e30 where masked/padded; stays f32.
    mask_add = ((word_mask_p - 1.0) * _BIG)[:, :, None]       # [B, Tp, 1]

    # one-time parameter prep: pre-transposed [H, Lp] bf16 MXU RHS, padded bias
    lfT = _pad_axis(params["label_feats"].astype(jnp.bfloat16).T, 1, Lp)   # [H, Lp]
    bias = _pad_axis(params["label_bias"].astype(jnp.float32), 1, Lp)      # [1, Lp]

    # single fused decoder launch for both r-drop passes
    logits0, logits1 = laat_decoder_rdrop(
        hidden0, hidden1, mask_add, lfT, bias,
        t_tile=t_tile, l_tile=l_tile, vmem_limit_bytes=vmem_limit_bytes)
    logits0 = logits0[:, :L]      # padded label columns never reach the loss
    logits1 = logits1[:, :L]

    # fused loss epilogue (single Pallas launch)
    bce0, bce1, kl = fused_losses(logits0, logits1, labels, kl_type=kl_type,
                                  label_avg_num=avg_label_num)
    c_loss = (bce0 + bce1) * 0.5

    loss = loss_config["rdrop_alpha"] * kl + c_loss * loss_config["code_loss_weight"]
    a_loss = jnp.zeros((1,), jnp.float32)   # c_alphas not produced by this decoder
    return {
        "kl_loss": loss_config["rdrop_alpha"] * kl,
        "c_loss": c_loss * loss_config["code_loss_weight"],
        "loss": loss,
        "alpha_loss": loss_config["alpha_weight"] * a_loss,
        "indices_next": None,
    }


if __name__ == "__main__":
    # small shapes, chosen so the decoder exercises multi-tile T-reduction,
    # L padding (300 -> 384) and T padding (200 -> 256 with masked tail).
    B, T, H, L, V = 2, 200, 128, 300, 100

    key = jax.random.PRNGKey(0)
    k1, k2, k3, k4, k5, k6, k7, k8 = jax.random.split(key, 8)

    input_word = jax.random.randint(k1, (B, T), 0, V)
    word_mask = (jax.random.uniform(k2, (B, T)) > 0.1).astype(jnp.float32)
    word_mask = word_mask.at[:, 0].set(1.0)
    labels = (jax.random.uniform(k3, (B, L)) > 0.9).astype(jnp.float32)

    params = {
        "emb": 0.02 * jax.random.normal(k4, (V, H), jnp.float32),
        "W_enc": 0.02 * jax.random.normal(k5, (H, H), jnp.float32),
        "b_enc": jnp.zeros((H,), jnp.float32),
        "label_feats": 0.02 * jax.random.normal(k6, (L, H), jnp.float32),
        "label_bias": 0.01 * jax.random.normal(k7, (1, L), jnp.float32),
    }

    loss_config = {
        "rdrop_alpha": 5.0,
        "code_loss_weight": 1.0,
        "main_code_loss_weight": 1.0,
        "alpha_weight": 0.0,
    }

    out = icd_forward_rdrop(params, input_word, word_mask, labels, loss_config,
                            kl_type="softmax", avg_label_num=8.0,
                            rng=k8, t_tile=64, l_tile=128)
    # exercise the sigmoid KL path (args.kl_type != 'softmax') as well
    out_v2 = icd_forward_rdrop(params, input_word, word_mask, labels, loss_config,
                               kl_type="sigmoid", avg_label_num=8.0,
                               rng=k8, t_tile=64, l_tile=128)

    jax.block_until_ready(out["loss"])
    jax.block_until_ready(out_v2["loss"])
    print("KERNEL_OK")
</pallas_src>

<mosaic_0001>
module attributes {stable_mosaic.version = 11 : i64} {
  func.func @_laat_rdrop_kernel(%arg0: i32, %arg1: i32, %arg2: i32, %arg3: memref<1x64x128xbf16, #tpu.memory_space<vmem>>, %arg4: memref<1x64x128xbf16, #tpu.memory_space<vmem>>, %arg5: memref<1x256x1xf32, #tpu.memory_space<vmem>>, %arg6: memref<128x128xbf16, #tpu.memory_space<vmem>>, %arg7: memref<1x128xf32, #tpu.memory_space<vmem>>, %arg8: memref<1x1x128xf32, #tpu.memory_space<vmem>>, %arg9: memref<1x1x128xf32, #tpu.memory_space<vmem>>, %arg10: memref<2x128xf32, #tpu.memory_space<vmem>>, %arg11: memref<2x128xf32, #tpu.memory_space<vmem>>, %arg12: memref<2x128xf32, #tpu.memory_space<vmem>>) attributes {dimension_semantics = [#tpu.dimension_semantics<parallel>, #tpu.dimension_semantics<parallel>, #tpu.dimension_semantics<arbitrary>], iteration_bounds = array<i64: 2, 3, 4>, scalar_prefetch = 0 : i64, scratch_operands = 3 : i64, tpu.core_type = #tpu.core_type<tc>, window_params = [{transform_indices = @transform_0, window_bounds = array<i64: 1, 64, 128>}, {transform_indices = @transform_1, window_bounds = array<i64: 1, 64, 128>}, {transform_indices = @transform_2, window_bounds = array<i64: 1, 256, 1>}, {transform_indices = @transform_3, window_bounds = array<i64: 128, 128>}, {transform_indices = @transform_4, window_bounds = array<i64: 1, 128>}, {transform_indices = @transform_5, window_bounds = array<i64: 1, 1, 128>}, {transform_indices = @transform_6, window_bounds = array<i64: 1, 1, 128>}]} {
    %c0_i32 = arith.constant 0 : i32
    %0 = arith.cmpi eq, %arg2, %c0_i32 : i32
    %1 = arith.extui %0 : i1 to i32
    %c0_i32_0 = arith.constant 0 : i32
    %2 = arith.cmpi ne, %1, %c0_i32_0 : i32
    scf.if %2 {
      %cst_41 = arith.constant -1.000000e+30 : f32
      %68 = vector.broadcast %cst_41 : f32 to vector<2x128xf32>
      %c0_42 = arith.constant 0 : index
      %c0_43 = arith.constant 0 : index
      %69 = vector.load %arg10[%c0_42, %c0_43] : memref<2x128xf32, #tpu.memory_space<vmem>>, vector<2x128xf32>
      tpu.vector_store %arg10[%c0_42, %c0_43], %68 {strides = array<i32>} : memref<2x128xf32, #tpu.memory_space<vmem>>, vector<2x128xf32>,
      %cst_44 = arith.constant 0.000000e+00 : f32
      %70 = vector.broadcast %cst_44 : f32 to vector<2x128xf32>
      %c0_45 = arith.constant 0 : index
      %c0_46 = arith.constant 0 : index
      %71 = vector.load %arg11[%c0_45, %c0_46] : memref<2x128xf32, #tpu.memory_space<vmem>>, vector<2x128xf32>
      tpu.vector_store %arg11[%c0_45, %c0_46], %70 {strides = array<i32>} : memref<2x128xf32, #tpu.memory_space<vmem>>, vector<2x128xf32>,
      %cst_47 = arith.constant 0.000000e+00 : f32
      %72 = vector.broadcast %cst_47 : f32 to vector<2x128xf32>
      %c0_48 = arith.constant 0 : index
      %c0_49 = arith.constant 0 : index
      %73 = vector.load %arg12[%c0_48, %c0_49] : memref<2x128xf32, #tpu.memory_space<vmem>>, vector<2x128xf32>
      tpu.vector_store %arg12[%c0_48, %c0_49], %72 {strides = array<i32>} : memref<2x128xf32, #tpu.memory_space<vmem>>, vector<2x128xf32>,
    } else {
    }
    %c0 = arith.constant 0 : index
    %c0_1 = arith.constant 0 : index
    %3 = vector.load %arg6[%c0, %c0_1] : memref<128x128xbf16, #tpu.memory_space<vmem>>, vector<128x128xbf16>
    %c64_i32 = arith.constant 64 : i32
    %4 = arith.muli %arg2, %c64_i32 : i32
    %5 = tpu.assume_multiple %4, 64 : i32
    %c0_2 = arith.constant 0 : index
    %6 = arith.index_cast %5 : i32 to index
    %c0_3 = arith.constant 0 : index
    %7 = vector.load %arg5[%c0_2, %6, %c0_3] : memref<1x256x1xf32, #tpu.memory_space<vmem>>, vector<1x64x1xf32>
    %8 = vector.shape_cast %7 : vector<1x64x1xf32> to vector<64x1xf32>
    %c0_4 = arith.constant 0 : index
    %c0_5 = arith.constant 0 : index
    %c0_6 = arith.constant 0 : index
    %9 = vector.load %arg3[%c0_4, %c0_5, %c0_6] : memref<1x64x128xbf16, #tpu.memory_space<vmem>>, vector<1x64x128xbf16>
    %10 = vector.shape_cast %9 : vector<1x64x128xbf16> to vector<64x128xbf16>
    %cst = arith.constant dense<0.000000e+00> : vector<64x128xf32>
    %11 = tpu.matmul %10, %3, %cst {dimension_numbers = #tpu.dot_dimension_numbers<[1], [0], [0], [1], [0, 0, 1, 1], [], []>} : vector<64x128xbf16>, vector<128x128xbf16>, vector<64x128xf32> -> vector<64x128xf32>
    %12 = vector.broadcast %8 : vector<64x1xf32> to vector<64x128xf32>
    %13 = arith.addf %11, %12 : vector<64x128xf32>
    %c0_7 = arith.constant 0 : index
    %c0_8 = arith.constant 0 : index
    %14 = vector.load %arg10[%c0_7, %c0_8] : memref<2x128xf32, #tpu.memory_space<vmem>>, vector<1x128xf32>
    %cst_9 = arith.constant dense<0xFF800000> : vector<128xf32>
    %15 = vector.multi_reduction <maximumf>, %13, %cst_9 [0] : vector<64x128xf32> to vector<128xf32>
    %16 = vector.shape_cast %15 : vector<128xf32> to vector<1x128xf32>
    %17 = arith.maximumf %14, %16 : vector<1x128xf32>
    %18 = arith.subf %14, %17 : vector<1x128xf32>
    %19 = math.exp %18 : vector<1x128xf32>
    %20 = vector.broadcast %17 : vector<1x128xf32> to vector<64x128xf32>
    %21 = arith.subf %13, %20 : vector<64x128xf32>
    %22 = math.exp %21 : vector<64x128xf32>
    %c0_10 = arith.constant 0 : index
    %c0_11 = arith.constant 0 : index
    %23 = vector.load %arg11[%c0_10, %c0_11] : memref<2x128xf32, #tpu.memory_space<vmem>>, vector<1x128xf32>
    %24 = arith.mulf %19, %23 : vector<1x128xf32>
    %cst_12 = arith.constant dense<0.000000e+00> : vector<128xf32>
    %25 = vector.multi_reduction <add>, %22, %cst_12 [0] : vector<64x128xf32> to vector<128xf32>
    %26 = vector.shape_cast %25 : vector<128xf32> to vector<1x128xf32>
    %27 = arith.addf %24, %26 : vector<1x128xf32>
    %c0_13 = arith.constant 0 : index
    %c0_14 = arith.constant 0 : index
    %28 = vector.load %arg11[%c0_13, %c0_14] : memref<2x128xf32, #tpu.memory_space<vmem>>, vector<1x128xf32>
    tpu.vector_store %arg11[%c0_13, %c0_14], %27 {strides = array<i32>} : memref<2x128xf32, #tpu.memory_space<vmem>>, vector<1x128xf32>,
    %c0_15 = arith.constant 0 : index
    %c0_16 = arith.constant 0 : index
    %29 = vector.load %arg12[%c0_15, %c0_16] : memref<2x128xf32, #tpu.memory_space<vmem>>, vector<1x128xf32>
    %30 = arith.mulf %19, %29 : vector<1x128xf32>
    %31 = arith.mulf %22, %11 : vector<64x128xf32>
    %cst_17 = arith.constant dense<0.000000e+00> : vector<128xf32>
    %32 = vector.multi_reduction <add>, %31, %cst_17 [0] : vector<64x128xf32> to vector<128xf32>
    %33 = vector.shape_cast %32 : vector<128xf32> to vector<1x128xf32>
    %34 = arith.addf %30, %33 : vector<1x128xf32>
    %c0_18 = arith.constant 0 : index
    %c0_19 = arith.constant 0 : index
    %35 = vector.load %arg12[%c0_18, %c0_19] : memref<2x128xf32, #tpu.memory_space<vmem>>, vector<1x128xf32>
    tpu.vector_store %arg12[%c0_18, %c0_19], %34 {strides = array<i32>} : memref<2x128xf32, #tpu.memory_space<vmem>>, vector<1x128xf32>,
    %c0_20 = arith.constant 0 : index
    %c0_21 = arith.constant 0 : index
    %36 = vector.load %arg10[%c0_20, %c0_21] : memref<2x128xf32, #tpu.memory_space<vmem>>, vector<1x128xf32>
    tpu.vector_store %arg10[%c0_20, %c0_21], %17 {strides = array<i32>} : memref<2x128xf32, #tpu.memory_space<vmem>>, vector<1x128xf32>,
    %c0_22 = arith.constant 0 : index
    %c0_23 = arith.constant 0 : index
    %c0_24 = arith.constant 0 : index
    %37 = vector.load %arg4[%c0_22, %c0_23, %c0_24] : memref<1x64x128xbf16, #tpu.memory_space<vmem>>, vector<1x64x128xbf16>
    %38 = vector.shape_cast %37 : vector<1x64x128xbf16> to vector<64x128xbf16>
    %cst_25 = arith.constant dense<0.000000e+00> : vector<64x128xf32>
    %39 = tpu.matmul %38, %3, %cst_25 {dimension_numbers = #tpu.dot_dimension_numbers<[1], [0], [0], [1], [0, 0, 1, 1], [], []>} : vector<64x128xbf16>, vector<128x128xbf16>, vector<64x128xf32> -> vector<64x128xf32>
    %40 = vector.broadcast %8 : vector<64x1xf32> to vector<64x128xf32>
    %41 = arith.addf %39, %40 : vector<64x128xf32>
    %c1 = arith.constant 1 : index
    %c0_26 = arith.constant 0 : index
    %42 = vector.load %arg10[%c1, %c0_26] : memref<2x128xf32, #tpu.memory_space<vmem>>, vector<1x128xf32>
    %cst_27 = arith.constant dense<0xFF800000> : vector<128xf32>
    %43 = vector.multi_reduction <maximumf>, %41, %cst_27 [0] : vector<64x128xf32> to vector<128xf32>
    %44 = vector.shape_cast %43 : vector<128xf32> to vector<1x128xf32>
    %45 = arith.maximumf %42, %44 : vector<1x128xf32>
    %46 = arith.subf %42, %45 : vector<1x128xf32>
    %47 = math.exp %46 : vector<1x128xf32>
    %48 = vector.broadcast %45 : vector<1x128xf32> to vector<64x128xf32>
    %49 = arith.subf %41, %48 : vector<64x128xf32>
    %50 = math.exp %49 : vector<64x128xf32>
    %c1_28 = arith.constant 1 : index
    %c0_29 = arith.constant 0 : index
    %51 = vector.load %arg11[%c1_28, %c0_29] : memref<2x128xf32, #tpu.memory_space<vmem>>, vector<1x128xf32>
    %52 = arith.mulf %47, %51 : vector<1x128xf32>
    %cst_30 = arith.constant dense<0.000000e+00> : vector<128xf32>
    %53 = vector.multi_reduction <add>, %50, %cst_30 [0] : vector<64x128xf32> to vector<128xf32>
    %54 = vector.shape_cast %53 : vector<128xf32> to vector<1x128xf32>
    %55 = arith.addf %52, %54 : vector<1x128xf32>
    %c1_31 = arith.constant 1 : index
    %c0_32 = arith.constant 0 : index
    %56 = vector.load %arg11[%c1_31, %c0_32] : memref<2x128xf32, #tpu.memory_space<vmem>>, vector<1x128xf32>
    tpu.vector_store %arg11[%c1_31, %c0_32], %55 {strides = array<i32>} : memref<2x128xf32, #tpu.memory_space<vmem>>, vector<1x128xf32>,
    %c1_33 = arith.constant 1 : index
    %c0_34 = arith.constant 0 : index
    %57 = vector.load %arg12[%c1_33, %c0_34] : memref<2x128xf32, #tpu.memory_space<vmem>>, vector<1x128xf32>
    %58 = arith.mulf %47, %57 : vector<1x128xf32>
    %59 = arith.mulf %50, %39 : vector<64x128xf32>
    %cst_35 = arith.constant dense<0.000000e+00> : vector<128xf32>
    %60 = vector.multi_reduction <add>, %59, %cst_35 [0] : vector<64x128xf32> to vector<128xf32>
    %61 = vector.shape_cast %60 : vector<128xf32> to vector<1x128xf32>
    %62 = arith.addf %58, %61 : vector<1x128xf32>
    %c1_36 = arith.constant 1 : index
    %c0_37 = arith.constant 0 : index
    %63 = vector.load %arg12[%c1_36, %c0_37] : memref<2x128xf32, #tpu.memory_space<vmem>>, vector<1x128xf32>
    tpu.vector_store %arg12[%c1_36, %c0_37], %62 {strides = array<i32>} : memref<2x128xf32, #tpu.memory_space<vmem>>, vector<1x128xf32>,
    %c1_38 = arith.constant 1 : index
    %c0_39 = arith.constant 0 : index
    %64 = vector.load %arg10[%c1_38, %c0_39] : memref<2x128xf32, #tpu.memory_space<vmem>>, vector<1x128xf32>
    tpu.vector_store %arg10[%c1_38, %c0_39], %45 {strides = array<i32>} : memref<2x128xf32, #tpu.memory_space<vmem>>, vector<1x128xf32>,
    %c3_i32 = arith.constant 3 : i32
    %65 = arith.cmpi eq, %arg2, %c3_i32 : i32
    %66 = arith.extui %65 : i1 to i32
    %c0_i32_40 = arith.constant 0 : i32
    %67 = arith.cmpi ne, %66, %c0_i32_40 : i32
    scf.if %67 {
      %c0_41 = arith.constant 0 : index
      %c0_42 = arith.constant 0 : index
      %68 = vector.load %arg11[%c0_41, %c0_42] : memref<2x128xf32, #tpu.memory_space<vmem>>, vector<2x128xf32>
      %cst_43 = arith.constant 9.99999971E-10 : f32
      %69 = vector.broadcast %cst_43 : f32 to vector<2x128xf32>
      %70 = arith.addf %68, %69 : vector<2x128xf32>
      %71 = tpu.reciprocal %70 {approx = true} : vector<2x128xf32> -> vector<2x128xf32>
      %c0_44 = arith.constant 0 : index
      %c0_45 = arith.constant 0 : index
      %72 = vector.load %arg12[%c0_44, %c0_45] : memref<2x128xf32, #tpu.memory_space<vmem>>, vector<2x128xf32>
      %73 = arith.mulf %72, %71 : vector<2x128xf32>
      %c0_46 = arith.constant 0 : index
      %c0_47 = arith.constant 0 : index
      %74 = vector.load %arg7[%c0_46, %c0_47] : memref<1x128xf32, #tpu.memory_space<vmem>>, vector<1x128xf32>
      %75 = vector.broadcast %74 : vector<1x128xf32> to vector<2x128xf32>
      %76 = arith.addf %73, %75 : vector<2x128xf32>
      %77 = vector.extract_strided_slice %76 {offsets = [0, 0], sizes = [1, 128], strides = [1, 1]} : vector<2x128xf32> to vector<1x128xf32>
      %c0_48 = arith.constant 0 : index
      %c0_49 = arith.constant 0 : index
      %c0_50 = arith.constant 0 : index
      %78 = vector.load %arg8[%c0_48, %c0_49, %c0_50] : memref<1x1x128xf32, #tpu.memory_space<vmem>>, vector<1x1x128xf32>
      %79 = vector.shape_cast %78 : vector<1x1x128xf32> to vector<1x128xf32>
      %80 = vector.shape_cast %77 : vector<1x128xf32> to vector<1x1x128xf32>
      tpu.vector_store %arg8[%c0_48, %c0_49, %c0_50], %80 {strides = array<i32>} : memref<1x1x128xf32, #tpu.memory_space<vmem>>, vector<1x1x128xf32>,
      %81 = vector.extract_strided_slice %76 {offsets = [1, 0], sizes = [1, 128], strides = [1, 1]} : vector<2x128xf32> to vector<1x128xf32>
      %c0_51 = arith.constant 0 : index
      %c0_52 = arith.constant 0 : index
      %c0_53 = arith.constant 0 : index
      %82 = vector.load %arg9[%c0_51, %c0_52, %c0_53] : memref<1x1x128xf32, #tpu.memory_space<vmem>>, vector<1x1x128xf32>
      %83 = vector.shape_cast %82 : vector<1x1x128xf32> to vector<1x128xf32>
      %84 = vector.shape_cast %81 : vector<1x128xf32> to vector<1x1x128xf32>
      tpu.vector_store %arg9[%c0_51, %c0_52, %c0_53], %84 {strides = array<i32>} : memref<1x1x128xf32, #tpu.memory_space<vmem>>, vector<1x1x128xf32>,
    } else {
    }
    return
  }
  func.func @transform_0(%arg0: i32, %arg1: i32, %arg2: i32) -> (i32, i32, i32) {
    %c0_i32 = arith.constant 0 : i32
    %c0_i32_0 = arith.constant 0 : i32
    return %arg0, %arg2, %c0_i32 : i32, i32, i32
  }
  func.func @transform_1(%arg0: i32, %arg1: i32, %arg2: i32) -> (i32, i32, i32) {
    %c0_i32 = arith.constant 0 : i32
    %c0_i32_0 = arith.constant 0 : i32
    return %arg0, %arg2, %c0_i32 : i32, i32, i32
  }
  func.func @transform_2(%arg0: i32, %arg1: i32, %arg2: i32) -> (i32, i32, i32) {
    %c0_i32 = arith.constant 0 : i32
    %c0_i32_0 = arith.constant 0 : i32
    %c0_i32_1 = arith.constant 0 : i32
    return %arg0, %c0_i32, %c0_i32_0 : i32, i32, i32
  }
  func.func @transform_3(%arg0: i32, %arg1: i32, %arg2: i32) -> (i32, i32) {
    %c0_i32 = arith.constant 0 : i32
    %c0_i32_0 = arith.constant 0 : i32
    return %c0_i32, %arg1 : i32, i32
  }
  func.func @transform_4(%arg0: i32, %arg1: i32, %arg2: i32) -> (i32, i32) {
    %c0_i32 = arith.constant 0 : i32
    %c0_i32_0 = arith.constant 0 : i32
    return %c0_i32, %arg1 : i32, i32
  }
  func.func @transform_5(%arg0: i32, %arg1: i32, %arg2: i32) -> (i32, i32, i32) {
    %c0_i32 = arith.constant 0 : i32
    %c0_i32_0 = arith.constant 0 : i32
    return %arg0, %c0_i32, %arg1 : i32, i32, i32
  }
  func.func @transform_6(%arg0: i32, %arg1: i32, %arg2: i32) -> (i32, i32, i32) {
    %c0_i32 = arith.constant 0 : i32
    %c0_i32_0 = arith.constant 0 : i32
    return %arg0, %c0_i32, %arg1 : i32, i32, i32
  }
}

</mosaic_0001>

<llo_original>
// kernel: tpu_custom_call.1
$region0: #{tpu_custom_call.1}
  #allocation0 [shape = 'u32[]', space=smem, size = 0x4, offset = 0x4, fixed_abs, tag = 'smem constant byte address 0x4 - core index']
  #allocation1 [shape = 'u32[144,128]{1,0:T(1,128)}', space=vmem, size = 0x12000, scoped, tag = 'internal scratch']
  #allocation2 [shape = 'f32[2,128]{1,0:T(2,128)}', space=vmem, size = 0x400, scoped, tag = 'scratch operand']
  #allocation3 [shape = 'f32[2,128]{1,0:T(2,128)}', space=vmem, size = 0x400, scoped, tag = 'scratch operand']
  #allocation4 [shape = 'f32[2,128]{1,0:T(2,128)}', space=vmem, size = 0x400, scoped, tag = 'scratch operand']
  %s0 = inlined_call_operand.vmem [shape: bf16[2,256,128], index: 0, kind: input, shape index: {}]
  %s1 = inlined_call_operand.vmem [shape: bf16[2,256,128], index: 1, kind: input, shape index: {}]
  %s2 = inlined_call_operand.vmem [shape: f32[2,256,1], index: 2, kind: input, shape index: {}]
  %s3 = inlined_call_operand.hbm [shape: bf16[128,384], index: 3, kind: input, shape index: {}]
  %s4 = inlined_call_operand.vmem [shape: f32[1,384], index: 4, kind: input, shape index: {}]
  %s5 = inlined_call_operand.hbm [shape: f32[2,1,384], index: 5, kind: output, shape index: {0}]
  %s6 = inlined_call_operand.hbm [shape: f32[2,1,384], index: 6, kind: output, shape index: {1}]
  %7 = xla_tuple %s5, %s6
  %s8 = sld [smem:[#allocation0]]
  $region73: #{tpu_custom_call.1} parent=0
    _
  %s10 = ssub.s32 1, %s8
  %s11 = scalar_select 0, %s10, %s8
  $region1: #{tpu_custom_call.1} parent=0
    #allocation5 [shape = 'u8[65536]{0}', space=vmem, size = 0x10000, scoped, tag = 'input window, operand 3']
    #allocation6 [shape = 's32[2]{0}', space=sflag, size = 0x8, scoped, tag = 'scoped memory for tpu_custom_call.1']
    #allocation7 [shape = 's32[2]{0}', space=sflag, size = 0x8, scoped, tag = 'scoped memory for tpu_custom_call.1']
    #allocation8 [shape = 'u8[1024]{0}', space=vmem, size = 0x400, scoped, tag = 'output window, operand 0']
    #allocation9 [shape = 'u8[1024]{0}', space=vmem, size = 0x400, scoped, tag = 'output window, operand 1']
    #allocation10 [shape = 's32[2]{0}', space=sflag, size = 0x8, scoped, tag = 'scoped memory for tpu_custom_call.1']
    %12 = vsyncpa [#allocation6], 0
    %s13 = scalar_lea.sflag [#allocation6], 1
    %14 = vsyncpa %s13, 0
    %15 = vsyncpa [#allocation7], 0
    %s16 = scalar_lea.sflag [#allocation7], 1
    %17 = vsyncpa %s16, 0
    %18 = vsyncpa [#allocation10], 0
    %s19 = scalar_lea.sflag [#allocation10], 1
    %20 = vsyncpa %s19, 0
    loop: start=0, step=1, limit=26
    $region2: #{tpu_custom_call.1} parent=1 // loop_pre_header
      _
    $region3: #{tpu_custom_call.1} parent=1 // loop_header
      %s22 = sphi 0, %s26
      %p23 = scmp.ge.s32.totalorder %s22, 26
      %s29 = sphi 0, %s48
      %s30 = sphi 0, %s44
      %s31 = sphi 0, %s40
      %s32 = sphi 0, %s29
      %s33 = sphi 0, %s30
      %s34 = sphi 0, %s31
      %s35 = sphi 0, %s32
      %s36 = sphi 0, %s33
      %s37 = sphi 0, %s34
      %s53 = sphi 0, %s55
      %s56 = sphi 0, %s53
      %s57 = sphi 0, %s56
      %s73 = sphi 0, %s57
      %s81 = sphi 0, %s83
      %s84 = sphi 0, %s81
      %s85 = sphi 0, %s84
      %s101 = sphi 0, %s85
      %s107 = sphi 0, %s109
      %s110 = sphi 0, %s107
      %s111 = sphi 0, %s110
      %s127 = sphi 0, %s111
      %s133 = sphi 0, %s135
      %s136 = sphi 0, %s133
      %s137 = sphi 0, %s136
      %s153 = sphi 0, %s137
      %s159 = sphi 0, %s161
      %s162 = sphi 0, %s159
      %s163 = sphi 0, %s162
      %s179 = sphi 0, %s163
      %s187 = sphi 0, %s189
      %s190 = sphi 0, %s187
      %s191 = sphi 0, %s190
      %s207 = sphi 0, %s191
      %s215 = sphi 0, %s217
      %s218 = sphi 0, %s215
      %s219 = sphi 0, %s218
      %s235 = sphi 0, %s219
    $region4: #{tpu_custom_call.1} parent=1 // loop_header_branch
      %25 = sbr.rel (%p23) target = $region8
    $region5: #{tpu_custom_call.1} parent=1 // loop_body
      %s27 = ssub.s32 %s22, 1
      %s28 = ssub.s32 %s22, 2
      %s38 = sadd.s32 1, %s31
      %p39 = scmp.ge.s32.totalorder %s38, 4
      %s40 = scalar_select %p39, 0, %s38
      %s41 = sadd.s32 1, %s30
      %s42 = scalar_select %p39, %s41, %s30
      %p43 = scmp.ge.s32.totalorder %s42, 3
      %s44 = scalar_select %p43, 0, %s42
      %s45 = sadd.s32 1, %s29
      %s46 = scalar_select %p43, %s45, %s29
      %p47 = scmp.ge.s32.totalorder %s46, 2
      %s48 = scalar_select %p47, 0, %s46
      %s49 = ssub.s32 %s29, %s48
      %s50 = ssub.s32 %s31, %s40
      %s51 = sor.u32 %s49, %s50
      %p52 = scmp.eq.s32.totalorder %s51, 0
      %s54 = sadd.s32 %s53, 1
      %s55 = scalar_select %p52, %s53, %s54
      %p58 = pneg %p52
      %p59 = scmp.eq.s32.totalorder %s22, 23
      %p60 = por %p58, %p59
      %p61 = scmp.ne.s32.totalorder %s53, %s56
      %p62 = scmp.eq.s32.totalorder %s22, 0
      %p63 = por %p61, %p62
      %p64 = scmp.ne.s32.totalorder %s53, %s56
      %p65 = scmp.eq.s32.totalorder %s27, 23
      %p66 = por %p64, %p65
      %p67 = scmp.ne.s32.totalorder %s56, %s57
      %p68 = scmp.eq.s32.totalorder %s27, 0
      %p69 = por %p67, %p68
      %p70 = scmp.ne.s32.totalorder %s56, %s57
      %p71 = scmp.eq.s32.totalorder %s28, 23
      %p72 = por %p70, %p71
      %p74 = scmp.ne.s32.totalorder %s57, %s73
      %p75 = scmp.eq.s32.totalorder %s28, 0
      %p76 = por %p74, %p75
      %s77 = ssub.s32 %s29, %s48
      %s78 = ssub.s32 %s31, %s40
      %s79 = sor.u32 %s77, %s78
      %p80 = scmp.eq.s32.totalorder %s79, 0
      %s82 = sadd.s32 %s81, 1
      %s83 = scalar_select %p80, %s81, %s82
      %p86 = pneg %p80
      %p87 = scmp.eq.s32.totalorder %s22, 23
      %p88 = por %p86, %p87
      %p89 = scmp.ne.s32.totalorder %s81, %s84
      %p90 = scmp.eq.s32.totalorder %s22, 0
      %p91 = por %p89, %p90
      %p92 = scmp.ne.s32.totalorder %s81, %s84
      %p93 = scmp.eq.s32.totalorder %s27, 23
      %p94 = por %p92, %p93
      %p95 = scmp.ne.s32.totalorder %s84, %s85
      %p96 = scmp.eq.s32.totalorder %s27, 0
      %p97 = por %p95, %p96
      %p98 = scmp.ne.s32.totalorder %s84, %s85
      %p99 = scmp.eq.s32.totalorder %s28, 23
      %p100 = por %p98, %p99
      %p102 = scmp.ne.s32.totalorder %s85, %s101
      %p103 = scmp.eq.s32.totalorder %s28, 0
      %p104 = por %p102, %p103
      %s105 = ssub.s32 %s29, %s48
      %p106 = scmp.eq.s32.totalorder %s105, 0
      %s108 = sadd.s32 %s107, 1
      %s109 = scalar_select %p106, %s107, %s108
      %p112 = pneg %p106
      %p113 = scmp.eq.s32.totalorder %s22, 23
      %p114 = por %p112, %p113
      %p115 = scmp.ne.s32.totalorder %s107, %s110
      %p116 = scmp.eq.s32.totalorder %s22, 0
      %p117 = por %p115, %p116
      %p118 = scmp.ne.s32.totalorder %s107, %s110
      %p119 = scmp.eq.s32.totalorder %s27, 23
      %p120 = por %p118, %p119
      %p121 = scmp.ne.s32.totalorder %s110, %s111
      %p122 = scmp.eq.s32.totalorder %s27, 0
      %p123 = por %p121, %p122
      %p124 = scmp.ne.s32.totalorder %s110, %s111
      %p125 = scmp.eq.s32.totalorder %s28, 23
      %p126 = por %p124, %p125
      %p128 = scmp.ne.s32.totalorder %s111, %s127
      %p129 = scmp.eq.s32.totalorder %s28, 0
      %p130 = por %p128, %p129
      %s131 = ssub.s32 %s30, %s44
      %p132 = scmp.eq.s32.totalorder %s131, 0
      %s134 = sadd.s32 %s133, 1
      %s135 = scalar_select %p132, %s133, %s134
      %p138 = pneg %p132
      %p139 = scmp.eq.s32.totalorder %s22, 23
      %p140 = por %p138, %p139
      %p141 = scmp.ne.s32.totalorder %s133, %s136
      %p142 = scmp.eq.s32.totalorder %s22, 0
      %p143 = por %p141, %p142
      %p144 = scmp.ne.s32.totalorder %s133, %s136
      %p145 = scmp.eq.s32.totalorder %s27, 23
      %p146 = por %p144, %p145
      %p147 = scmp.ne.s32.totalorder %s136, %s137
      %p148 = scmp.eq.s32.totalorder %s27, 0
      %p149 = por %p147, %p148
      %p150 = scmp.ne.s32.totalorder %s136, %s137
      %p151 = scmp.eq.s32.totalorder %s28, 23
      %p152 = por %p150, %p151
      %p154 = scmp.ne.s32.totalorder %s137, %s153
      %p155 = scmp.eq.s32.totalorder %s28, 0
      %p156 = por %p154, %p155
      %s157 = ssub.s32 %s30, %s44
      %p158 = scmp.eq.s32.totalorder %s157, 0
      %s160 = sadd.s32 %s159, 1
      %s161 = scalar_select %p158, %s159, %s160
      %p164 = pneg %p158
      %p165 = scmp.eq.s32.totalorder %s22, 23
      %p166 = por %p164, %p165
      %p167 = scmp.ne.s32.totalorder %s159, %s162
      %p168 = scmp.eq.s32.totalorder %s22, 0
      %p169 = por %p167, %p168
      %p170 = scmp.ne.s32.totalorder %s159, %s162
      %p171 = scmp.eq.s32.totalorder %s27, 23
      %p172 = por %p170, %p171
      %p173 = scmp.ne.s32.totalorder %s162, %s163
      %p174 = scmp.eq.s32.totalorder %s27, 0
      %p175 = por %p173, %p174
      %p176 = scmp.ne.s32.totalorder %s162, %s163
      %p177 = scmp.eq.s32.totalorder %s28, 23
      %p178 = por %p176, %p177
      %p180 = scmp.ne.s32.totalorder %s163, %s179
      %p181 = scmp.eq.s32.totalorder %s28, 0
      %p182 = por %p180, %p181
      %s183 = ssub.s32 %s29, %s48
      %s184 = ssub.s32 %s30, %s44
      %s185 = sor.u32 %s183, %s184
      %p186 = scmp.eq.s32.totalorder %s185, 0
      %s188 = sadd.s32 %s187, 1
      %s189 = scalar_select %p186, %s187, %s188
      %p192 = pneg %p186
      %p193 = scmp.eq.s32.totalorder %s22, 23
      %p194 = por %p192, %p193
      %p195 = scmp.ne.s32.totalorder %s187, %s190
      %p196 = scmp.eq.s32.totalorder %s22, 0
      %p197 = por %p195, %p196
      %p198 = scmp.ne.s32.totalorder %s187, %s190
      %p199 = scmp.eq.s32.totalorder %s27, 23
      %p200 = por %p198, %p199
      %p201 = scmp.ne.s32.totalorder %s190, %s191
      %p202 = scmp.eq.s32.totalorder %s27, 0
      %p203 = por %p201, %p202
      %p204 = scmp.ne.s32.totalorder %s190, %s191
      %p205 = scmp.eq.s32.totalorder %s28, 23
      %p206 = por %p204, %p205
      %p208 = scmp.ne.s32.totalorder %s191, %s207
      %p209 = scmp.eq.s32.totalorder %s28, 0
      %p210 = por %p208, %p209
      %s211 = ssub.s32 %s29, %s48
      %s212 = ssub.s32 %s30, %s44
      %s213 = sor.u32 %s211, %s212
      %p214 = scmp.eq.s32.totalorder %s213, 0
      %s216 = sadd.s32 %s215, 1
      %s217 = scalar_select %p214, %s215, %s216
      %p220 = pneg %p214
      %p221 = scmp.eq.s32.totalorder %s22, 23
      %p222 = por %p220, %p221
      %p223 = scmp.ne.s32.totalorder %s215, %s218
      %p224 = scmp.eq.s32.totalorder %s22, 0
      %p225 = por %p223, %p224
      %p226 = scmp.ne.s32.totalorder %s215, %s218
      %p227 = scmp.eq.s32.totalorder %s27, 23
      %p228 = por %p226, %p227
      %p229 = scmp.ne.s32.totalorder %s218, %s219
      %p230 = scmp.eq.s32.totalorder %s27, 0
      %p231 = por %p229, %p230
      %p232 = scmp.ne.s32.totalorder %s218, %s219
      %p233 = scmp.eq.s32.totalorder %s28, 23
      %p234 = por %p232, %p233
      %p236 = scmp.ne.s32.totalorder %s219, %s235
      %p237 = scmp.eq.s32.totalorder %s28, 0
      %p238 = por %p236, %p237
      %p239 = scmp.le.s32.totalorder 1, %s22
      %p240 = scmp.lt.s32.totalorder %s22, 25
      %p241 = pnand %p239, %p240
      %p242 = pneg %p241
      // Predicated region
      $region9: #{tpu_custom_call.1} parent=5 // pred_check
        _
      $region10: #{tpu_custom_call.1} parent=5 // pred_check_branch
        %244 = sbr.rel (%p241) target = $region12
      $region11: #{tpu_custom_call.1} parent=5 // pred_region
        %s245 = ssub.s32 %s22, 1
      $region12: #{tpu_custom_call.1} parent=5 // pred_fallthru
        _
      %p246 = scmp.lt.s32.totalorder %s22, 24
      // Predicated region
      $region13: #{tpu_custom_call.1} parent=5 // pred_check
        %p247 = pneg %p246
      $region14: #{tpu_custom_call.1} parent=5 // pred_check_branch
        %249 = sbr.rel (%p247) target = $region16
      $region15: #{tpu_custom_call.1} parent=5 // pred_region
        // Predicated region
        $region17: #{tpu_custom_call.1} parent=15 // pred_check
          %p250 = pneg %p63
        $region18: #{tpu_custom_call.1} parent=15 // pred_check_branch
          %252 = sbr.rel (%p250) target = $region20
        $region19: #{tpu_custom_call.1} parent=15 // pred_region
          %s253 = smul.u32 8, %s31
          %p254 = scmp.lt.s32.totalorder %s29, 1
          %s255 = scalar_select %p254, %s29, 1
          %p256 = scmp.lt.s32.totalorder %s253, 31
          %s257 = scalar_select %p256, %s253, 31
          %s258 = smul.addr %s255, 32
          %s259 = sadd.s32 %s257, %s258
          %s260 = smul.addr %s259, 4
          %s261 = scalar_lea.vmem %s0, %s260
          %s262 = smul.u32 8, %s31
        $region20: #{tpu_custom_call.1} parent=15 // pred_fallthru
          _
        // Predicated region
        $region21: #{tpu_custom_call.1} parent=15 // pred_check
          %p263 = pneg %p91
        $region22: #{tpu_custom_call.1} parent=15 // pred_check_branch
          %265 = sbr.rel (%p263) target = $region24
        $region23: #{tpu_custom_call.1} parent=15 // pred_region
          %s266 = smul.u32 8, %s31
          %p267 = scmp.lt.s32.totalorder %s29, 1
          %s268 = scalar_select %p267, %s29, 1
          %p269 = scmp.lt.s32.totalorder %s266, 31
          %s270 = scalar_select %p269, %s266, 31
          %s271 = smul.addr %s268, 32
          %s272 = sadd.s32 %s270, %s271
          %s273 = smul.addr %s272, 4
          %s274 = scalar_lea.vmem %s1, %s273
          %s275 = smul.u32 8, %s31
        $region24: #{tpu_custom_call.1} parent=15 // pred_fallthru
          _
        // Predicated region
        $region25: #{tpu_custom_call.1} parent=15 // pred_check
          %p276 = pneg %p117
        $region26: #{tpu_custom_call.1} parent=15 // pred_check_branch
          %278 = sbr.rel (%p276) target = $region28
        $region27: #{tpu_custom_call.1} parent=15 // pred_region
          %p279 = scmp.lt.s32.totalorder %s29, 1
          %s280 = scalar_select %p279, %s29, 1
          %s281 = smul.addr %s280, 32
          %s282 = smul.addr %s281, 8
          %s283 = scalar_lea.vmem %s2, %s282
        $region28: #{tpu_custom_call.1} parent=15 // pred_fallthru
          _
        // Predicated region
        $region29: #{tpu_custom_call.1} parent=15 // pred_check
          %p284 = pneg %p143
        $region30: #{tpu_custom_call.1} parent=15 // pred_check_branch
          %286 = sbr.rel (%p284) target = $region32
        $region31: #{tpu_custom_call.1} parent=15 // pred_region
          %s287 = sand.u32 %s133, 1
          %s288 = scalar_lea.sflag [#allocation6], %s287
          %s289 = sand.u32 %s133, 1
          %s290 = smul.addr %s289, 64
          %s291 = scalar_lea.vmem [#allocation5], %s290
          %s293 = ssub.s32 1024, 1024
          %294 = vsyncadd %s288, %s293
          %s295 = smul.addr %s30, 64
          %s296 = scalar_lea.hbm %s3, %s295
          %s297 = sshll.u32 %s291, 4
          %s298 = int_to_ptr.vmem [resolvable:$true] %s297
          %303 = dma.hbm_to_vmem [thread:$0]  %s296, 1024, %s298, %s288, 192, 64, 4
        $region32: #{tpu_custom_call.1} parent=15 // pred_fallthru
          _
        // Predicated region
        $region33: #{tpu_custom_call.1} parent=15 // pred_check
          %p304 = pneg %p169
        $region34: #{tpu_custom_call.1} parent=15 // pred_check_branch
          %306 = sbr.rel (%p304) target = $region36
        $region35: #{tpu_custom_call.1} parent=15 // pred_region
          %p307 = scmp.lt.s32.totalorder %s30, 2
          %s308 = scalar_select %p307, %s30, 2
          %s309 = scalar_lea.vmem %s4, %s308
        $region36: #{tpu_custom_call.1} parent=15 // pred_fallthru
          _
      $region16: #{tpu_custom_call.1} parent=5 // pred_fallthru
        _
      %p310 = scmp.le.s32.totalorder 1, %s22
      %p311 = scmp.lt.s32.totalorder %s22, 25
      %p312 = pnand %p310, %p311
      %p313 = pneg %p312
      // Predicated region
      $region37: #{tpu_custom_call.1} parent=5 // pred_check
        _
      $region38: #{tpu_custom_call.1} parent=5 // pred_check_branch
        %315 = sbr.rel (%p312) target = $region40
      $region39: #{tpu_custom_call.1} parent=5 // pred_region
        %s316 = ssub.s32 %s22, 1
        %s317 = sand.u32 %s136, 1
        %s318 = scalar_lea.sflag [#allocation6], %s317
        %s319 = sand.u32 %s136, 1
        %s320 = smul.addr %s319, 64
        %s321 = scalar_lea.vmem [#allocation5], %s320
        // Predicated region
        $region41: #{tpu_custom_call.1} parent=39 // pred_check
          %p322 = pneg %p149
        $region42: #{tpu_custom_call.1} parent=39 // pred_check_branch
          %324 = sbr.rel (%p322) target = $region44
        $region43: #{tpu_custom_call.1} parent=39 // pred_region
          %325 = dma.done %s318, 1024
        $region44: #{tpu_custom_call.1} parent=39 // pred_fallthru
          _
        %s326 = smul.u32 8, %s34
        %p327 = scmp.lt.s32.totalorder %s32, 1
        %s328 = scalar_select %p327, %s32, 1
        %p329 = scmp.lt.s32.totalorder %s326, 31
        %s330 = scalar_select %p329, %s326, 31
        %s331 = smul.addr %s328, 32
        %s332 = sadd.s32 %s330, %s331
        %s333 = smul.addr %s332, 4
        %s334 = scalar_lea.vmem %s0, %s333
        %p335 = pneg %p69
        %p336 = pneg %p66
        %s337 = smul.u32 8, %s34
        %p338 = scmp.lt.s32.totalorder %s32, 1
        %s339 = scalar_select %p338, %s32, 1
        %p340 = scmp.lt.s32.totalorder %s337, 31
        %s341 = scalar_select %p340, %s337, 31
        %s342 = smul.addr %s339, 32
        %s343 = sadd.s32 %s341, %s342
        %s344 = smul.addr %s343, 4
        %s345 = scalar_lea.vmem %s1, %s344
        %p346 = pneg %p97
        %p347 = pneg %p94
        %p348 = scmp.lt.s32.totalorder %s32, 1
        %s349 = scalar_select %p348, %s32, 1
        %s350 = smul.addr %s349, 32
        %s351 = smul.addr %s350, 8
        %s352 = scalar_lea.vmem %s2, %s351
        %p353 = pneg %p123
        %p354 = pneg %p120
        %s355 = sand.u32 %s136, 1
        %s356 = scalar_lea.sflag [#allocation6], %s355
        %s357 = sand.u32 %s136, 1
        %s358 = smul.addr %s357, 64
        %s359 = scalar_lea.vmem [#allocation5], %s358
        %p360 = pneg %p149
        %p361 = pneg %p146
        %p362 = scmp.lt.s32.totalorder %s33, 2
        %s363 = scalar_select %p362, %s33, 2
        %s364 = scalar_lea.vmem %s4, %s363
        %p365 = pneg %p175
        %p366 = pneg %p172
        %p367 = pneg %p203
        %p368 = pneg %p200
        %s369 = sand.u32 %s190, 1
        %s370 = scalar_lea.sflag [#allocation7], %s369
        %s371 = sand.u32 %s190, 1
        %s372 = scalar_lea.vmem [#allocation8], %s371
        %p373 = pneg %p231
        %p374 = pneg %p228
        %s375 = sand.u32 %s218, 1
        %s376 = scalar_lea.sflag [#allocation10], %s375
        %s377 = sand.u32 %s218, 1
        %s378 = scalar_lea.vmem [#allocation9], %s377
        %s379 = smul.u32 8, %s34
        %p380 = scmp.lt.s32.totalorder %s32, 1
        %s381 = scalar_select %p380, %s32, 1
        %p382 = scmp.lt.s32.totalorder %s379, 31
        %s383 = scalar_select %p382, %s379, 31
        %s384 = smul.addr %s381, 32
        %s385 = sadd.s32 %s383, %s384
        %s386 = smul.addr %s385, 4
        %s387 = scalar_lea.vmem %s0, %s386
        %s388 = smul.u32 8, %s34
        %s389 = smul.u32 8, %s34
        %p390 = scmp.lt.s32.totalorder %s32, 1
        %s391 = scalar_select %p390, %s32, 1
        %p392 = scmp.lt.s32.totalorder %s389, 31
        %s393 = scalar_select %p392, %s389, 31
        %s394 = smul.addr %s391, 32
        %s395 = sadd.s32 %s393, %s394
        %s396 = smul.addr %s395, 4
        %s397 = scalar_lea.vmem %s1, %s396
        %s398 = smul.u32 8, %s34
        %p399 = scmp.lt.s32.totalorder %s32, 1
        %s400 = scalar_select %p399, %s32, 1
        %s401 = smul.addr %s400, 32
        %s402 = smul.addr %s401, 8
        %s403 = scalar_lea.vmem %s2, %s402
        %p404 = scmp.lt.s32.totalorder %s33, 2
        %s405 = scalar_select %p404, %s33, 2
        %s406 = scalar_lea.vmem %s4, %s405
        %p408 = scmp.eq.s32.totalorder %s34, 0
        // Predicated region
        $region45: #{tpu_custom_call.1} parent=39 // pred_check
          %p409 = pneg %p408
        $region46: #{tpu_custom_call.1} parent=39 // pred_check_branch
          %411 = sbr.rel (%p409) target = $region48
        $region47: #{tpu_custom_call.1} parent=39 // pred_region
          %412 = vst [vmem:[#allocation2] sm:$0x3] -1e+30
          %413 = vst [vmem:[#allocation3] sm:$0x3] 0.0
          %414 = vst [vmem:[#allocation4] sm:$0x3] 0.0
        $region48: #{tpu_custom_call.1} parent=39 // pred_fallthru
          _
        %v415 = vld [vmem:[%s321] sm:$0xf]
        %v416 = vld [vmem:[%s321 + $0x4] sm:$0xf]
        %v417 = vld [vmem:[%s321 + $0x8] sm:$0xf]
        %v418 = vld [vmem:[%s321 + $0xc] sm:$0xf]
        %v419 = vld [vmem:[%s321 + $0x10] sm:$0xf]
        %v420 = vld [vmem:[%s321 + $0x14] sm:$0xf]
        %v421 = vld [vmem:[%s321 + $0x18] sm:$0xf]
        %v422 = vld [vmem:[%s321 + $0x1c] sm:$0xf]
        %v423 = vld [vmem:[%s321 + $0x20] sm:$0xf]
        %v424 = vld [vmem:[%s321 + $0x24] sm:$0xf]
        %v425 = vld [vmem:[%s321 + $0x28] sm:$0xf]
        %v426 = vld [vmem:[%s321 + $0x2c] sm:$0xf]
        %v427 = vld [vmem:[%s321 + $0x30] sm:$0xf]
        %v428 = vld [vmem:[%s321 + $0x34] sm:$0xf]
        %v429 = vld [vmem:[%s321 + $0x38] sm:$0xf]
        %v430 = vld [vmem:[%s321 + $0x3c] sm:$0xf]
        %s431 = smul.u32 %s34, 64
        %s432 = scalar_lea.vmem %s403, %s431
        %v433 = vld [vmem:[%s432] sm:$0xff]
        %v434 = vld [vmem:[%s432 + $0x8] sm:$0xff]
        %v435 = vld [vmem:[%s432 + $0x10] sm:$0xff]
        %v436 = vld [vmem:[%s432 + $0x18] sm:$0xff]
        %v437 = vld [vmem:[%s432 + $0x20] sm:$0xff]
        %v438 = vld [vmem:[%s432 + $0x28] sm:$0xff]
        %v439 = vld [vmem:[%s432 + $0x30] sm:$0xff]
        %v440 = vld [vmem:[%s432 + $0x38] sm:$0xff]
        %v441 = vld [vmem:[%s387] sm:$0xf]
        %v442 = vld [vmem:[%s387 + $0x4] sm:$0xf]
        %v443 = vld [vmem:[%s387 + $0x8] sm:$0xf]
        %v444 = vld [vmem:[%s387 + $0xc] sm:$0xf]
        %v445 = vld [vmem:[%s387 + $0x10] sm:$0xf]
        %v446 = vld [vmem:[%s387 + $0x14] sm:$0xf]
        %v447 = vld [vmem:[%s387 + $0x18] sm:$0xf]
        %v448 = vld [vmem:[%s387 + $0x1c] sm:$0xf]
        %v457 = vunpack.c.l.b16 %v441
        %v458 = vunpack.c.l.b16 %v442
        %v459 = vunpack.c.l.b16 %v443
        %v460 = vunpack.c.l.b16 %v444
        %v461 = vunpack.c.l.b16 %v445
        %v462 = vunpack.c.l.b16 %v446
        %v463 = vunpack.c.l.b16 %v447
        %v464 = vunpack.c.l.b16 %v448
        %v465 = vpack.c.b16 %v458, %v457
        %v466 = vpack.c.b16 %v460, %v459
        %v467 = vpack.c.b16 %v462, %v461
        %v468 = vpack.c.b16 %v464, %v463
        %v489 = vunpack.c.l.b16 %v415
        %v490 = vunpack.c.l.b16 %v416
        %v491 = vunpack.c.l.b16 %v417
        %v492 = vunpack.c.l.b16 %v418
        %v493 = vunpack.c.l.b16 %v419
        %v494 = vunpack.c.l.b16 %v420
        %v495 = vunpack.c.l.b16 %v421
        %v496 = vunpack.c.l.b16 %v422
        %v497 = vunpack.c.l.b16 %v423
        %v498 = vunpack.c.l.b16 %v424
        %v499 = vunpack.c.l.b16 %v425
        %v500 = vunpack.c.l.b16 %v426
        %v501 = vunpack.c.l.b16 %v427
        %v502 = vunpack.c.l.b16 %v428
        %v503 = vunpack.c.l.b16 %v429
        %v504 = vunpack.c.l.b16 %v430
        %v505 = vpack.c.b16 %v490, %v489
        %v506 = vpack.c.b16 %v492, %v491
        %v507 = vpack.c.b16 %v494, %v493
        %v508 = vpack.c.b16 %v496, %v495
        %v509 = vpack.c.b16 %v498, %v497
        %v510 = vpack.c.b16 %v500, %v499
        %v511 = vpack.c.b16 %v502, %v501
        %v512 = vpack.c.b16 %v504, %v503
        %521 = vmatprep.subr.bf16.mxu0 0
        %522 = vmatpush1.bf16.msra.mxu0 %v512
        %523 = vmatprep.subr.bf16.mxu0 0
        %524 = vmatpush1.bf16.msra.mxu0 %v511
        %525 = vmatprep.subr.bf16.mxu0 0
        %526 = vmatpush1.bf16.msra.mxu0 %v510
        %527 = vmatprep.subr.bf16.mxu0 0
        %528 = vmatpush1.bf16.msra.mxu0 %v509
        %529 = vmatprep.subr.bf16.mxu0 0
        %530 = vmatpush1.bf16.msra.mxu0 %v508
        %531 = vmatprep.subr.bf16.mxu0 0
        %532 = vmatpush1.bf16.msra.mxu0 %v507
        %533 = vmatprep.subr.bf16.mxu0 0
        %534 = vmatpush1.bf16.msra.mxu0 %v506
        %535 = vmatprep.subr.bf16.mxu0 0
        %536 = vmatpush1.bf16.msra.mxu0 %v505
        %537 = vmatprep.subr.bf16.mxu0 0
        %538 = vmatpush2.bf16.msra.mxu0 0
        %539 = vmatprep.subr.bf16.mxu0 0
        %540 = vmatpush2.bf16.msra.mxu0 0
        %541 = vmatprep.subr.bf16.mxu0 0
        %542 = vmatpush2.bf16.msra.mxu0 0
        %543 = vmatprep.subr.bf16.mxu0 0
        %544 = vmatpush2.bf16.msra.mxu0 0
        %545 = vmatprep.subr.bf16.mxu0 0
        %546 = vmatpush2.bf16.msra.mxu0 0
        %547 = vmatprep.subr.bf16.mxu0 0
        %548 = vmatpush2.bf16.msra.mxu0 0
        %549 = vmatprep.subr.bf16.mxu0 0
        %550 = vmatpush2.bf16.msra.mxu0 0
        %551 = vmatprep.subr.bf16.mxu0 0
        %552 = vmatpush2.bf16.msra.mxu0 0
        %553 = vmatprep.mubr.bf16.mxu0 0
        %554 = vmatmul.mubr.bf16.gmra.mxu0 %v465
        %v555 = vpop.f32.mrf.mxu0
        %v556 = vadd.f32 0.0, %v555
        %v557 = vpop.f32.mrf.mxu0
        %v558 = vpop.f32.mrf.mxu0
        %v559 = vadd.f32 0.0, %v558
        %v560 = vpop.f32.mrf.mxu0
        %561 = vmatprep.mubr.bf16.mxu0 0
        %562 = vmatmul.mubr.bf16.gmra.mxu0 %v466
        %v563 = vpop.f32.mrf.mxu0
        %v564 = vadd.f32 0.0, %v563
        %v565 = vpop.f32.mrf.mxu0
        %v566 = vpop.f32.mrf.mxu0
        %v567 = vadd.f32 0.0, %v566
        %v568 = vpop.f32.mrf.mxu0
        %569 = vmatprep.mubr.bf16.mxu0 0
        %570 = vmatmul.mubr.bf16.gmra.mxu0 %v467
        %v571 = vpop.f32.mrf.mxu0
        %v572 = vadd.f32 0.0, %v571
        %v573 = vpop.f32.mrf.mxu0
        %v574 = vpop.f32.mrf.mxu0
        %v575 = vadd.f32 0.0, %v574
        %v576 = vpop.f32.mrf.mxu0
        %577 = vmatprep.mubr.bf16.mxu0 0
        %578 = vmatmul.mubr.bf16.gmra.mxu0 %v468
        %v579 = vpop.f32.mrf.mxu0
        %v580 = vadd.f32 0.0, %v579
        %v581 = vpop.f32.mrf.mxu0
        %v582 = vpop.f32.mrf.mxu0
        %v583 = vadd.f32 0.0, %v582
        %v584 = vpop.f32.mrf.mxu0
        %585 = vdwg.mxu0
        %587 = vset.pattern.permute.xlu0 0
        %588 = vperm.xlu0 %587, %v433
        %v589 = vpop.permute.xlu0 %588
        %592 = vset.pattern.permute.xlu0 0
        %593 = vperm.xlu0 %592, %v434
        %v594 = vpop.permute.xlu0 %593
        %597 = vset.pattern.permute.xlu0 0
        %598 = vperm.xlu0 %597, %v435
        %v599 = vpop.permute.xlu0 %598
        %602 = vset.pattern.permute.xlu0 0
        %603 = vperm.xlu0 %602, %v436
        %v604 = vpop.permute.xlu0 %603
        %607 = vset.pattern.permute.xlu0 0
        %608 = vperm.xlu0 %607, %v437
        %v609 = vpop.permute.xlu0 %608
        %612 = vset.pattern.permute.xlu0 0
        %613 = vperm.xlu0 %612, %v438
        %v614 = vpop.permute.xlu0 %613
        %617 = vset.pattern.permute.xlu0 0
        %618 = vperm.xlu0 %617, %v439
        %v619 = vpop.permute.xlu0 %618
        %622 = vset.pattern.permute.xlu0 0
        %623 = vperm.xlu0 %622, %v440
        %v624 = vpop.permute.xlu0 %623
        %v626 = vadd.f32 %v556, %v589
        %v627 = vadd.f32 %v559, %v594
        %v628 = vadd.f32 %v564, %v599
        %v629 = vadd.f32 %v567, %v604
        %v630 = vadd.f32 %v572, %v609
        %v631 = vadd.f32 %v575, %v614
        %v632 = vadd.f32 %v580, %v619
        %v633 = vadd.f32 %v583, %v624
        %v634 = vld [vmem:[#allocation2] sm:$0x1]
        %v635 = vmax.f32 %v626, %v630
        %v636 = vmax.f32 %v627, %v631
        %v637 = vmax.f32 %v628, %v632
        %v638 = vmax.f32 %v629, %v633
        %v639 = vmax.f32 %v635, %v636
        %v640 = vmax.f32 %v637, %v638
        %v641 = vmax.f32 %v639, %v640
        %v642 = vrot.slane %v641, 4
        %v643 = vmax.f32 %v641, %v642
        %v644 = vrot.slane %v643, 2
        %v645 = vmax.f32 %v643, %v644
        %v646 = vrot.slane %v645, 1
        %v647 = vmax.f32 %v645, %v646
        %v648 = vmax.f32 %v634, %v647
        %v649 = vsub.f32 %v634, %v648
        %v650 = vmul.f32 %v649, 1.442695
        %v651 = vpow.pop %v650
        %v652 = vlaneseq
        %v653 = vshrl.u32 %v652, 7
        %v654 = vsub.s32 0, %v653
        %v655 = vrot.slane %v648, %v654
        %v656 = vsub.f32 %v626, %v655
        %v657 = vsub.f32 %v627, %v655
        %v658 = vsub.f32 %v628, %v655
        %v659 = vsub.f32 %v629, %v655
        %v660 = vsub.f32 %v630, %v655
        %v661 = vsub.f32 %v631, %v655
        %v662 = vsub.f32 %v632, %v655
        %v663 = vsub.f32 %v633, %v655
        %v664 = vmul.f32 %v656, 1.442695
        %v665 = vpow.pop %v664
        %v666 = vmul.f32 %v657, 1.442695
        %v667 = vpow.pop %v666
        %v668 = vmul.f32 %v658, 1.442695
        %v669 = vpow.pop %v668
        %v670 = vmul.f32 %v659, 1.442695
        %v671 = vpow.pop %v670
        %v672 = vmul.f32 %v660, 1.442695
        %v673 = vpow.pop %v672
        %v674 = vmul.f32 %v661, 1.442695
        %v675 = vpow.pop %v674
        %v676 = vmul.f32 %v662, 1.442695
        %v677 = vpow.pop %v676
        %v678 = vmul.f32 %v663, 1.442695
        %v679 = vpow.pop %v678
        %v680 = vld [vmem:[#allocation3] sm:$0x1]
        %v681 = vmul.f32 %v651, %v680
        %v682 = vadd.f32 %v665, %v667
        %v683 = vadd.f32 %v682, %v669
        %v684 = vadd.f32 %v683, %v671
        %v685 = vadd.f32 %v684, %v673
        %v686 = vadd.f32 %v685, %v675
        %v687 = vadd.f32 %v686, %v677
        %v688 = vadd.f32 %v687, %v679
        %v689 = vrot.slane %v688, 4
        %v690 = vadd.f32 %v688, %v689
        %v691 = vrot.slane %v690, 2
        %v692 = vadd.f32 %v690, %v691
        %v693 = vrot.slane %v692, 1
        %v694 = vadd.f32 %v692, %v693
        %v695 = vadd.f32 %v681, %v694
        %696 = vst [vmem:[#allocation3] sm:$0x1] %v695
        %v697 = vld [vmem:[#allocation4] sm:$0x1]
        %v698 = vmul.f32 %v651, %v697
        %v699 = vmul.f32 %v665, %v556
        %v700 = vmul.f32 %v667, %v559
        %v701 = vmul.f32 %v669, %v564
        %v702 = vmul.f32 %v671, %v567
        %v703 = vmul.f32 %v673, %v572
        %v704 = vmul.f32 %v675, %v575
        %v705 = vmul.f32 %v677, %v580
        %v706 = vmul.f32 %v679, %v583
        %v707 = vadd.f32 %v699, %v700
        %v708 = vadd.f32 %v707, %v701
        %v709 = vadd.f32 %v708, %v702
        %v710 = vadd.f32 %v709, %v703
        %v711 = vadd.f32 %v710, %v704
        %v712 = vadd.f32 %v711, %v705
        %v713 = vadd.f32 %v712, %v706
        %v714 = vrot.slane %v713, 4
        %v715 = vadd.f32 %v713, %v714
        %v716 = vrot.slane %v715, 2
        %v717 = vadd.f32 %v715, %v716
        %v718 = vrot.slane %v717, 1
        %v719 = vadd.f32 %v717, %v718
        %v720 = vadd.f32 %v698, %v719
        %721 = vst [vmem:[#allocation4] sm:$0x1] %v720
        %722 = vst [vmem:[#allocation2] sm:$0x1] %v648
        %v723 = vld [vmem:[%s397] sm:$0xf]
        %v724 = vld [vmem:[%s397 + $0x4] sm:$0xf]
        %v725 = vld [vmem:[%s397 + $0x8] sm:$0xf]
        %v726 = vld [vmem:[%s397 + $0xc] sm:$0xf]
        %v727 = vld [vmem:[%s397 + $0x10] sm:$0xf]
        %v728 = vld [vmem:[%s397 + $0x14] sm:$0xf]
        %v729 = vld [vmem:[%s397 + $0x18] sm:$0xf]
        %v730 = vld [vmem:[%s397 + $0x1c] sm:$0xf]
        %v739 = vunpack.c.l.b16 %v723
        %v740 = vunpack.c.l.b16 %v724
        %v741 = vunpack.c.l.b16 %v725
        %v742 = vunpack.c.l.b16 %v726
        %v743 = vunpack.c.l.b16 %v727
        %v744 = vunpack.c.l.b16 %v728
        %v745 = vunpack.c.l.b16 %v729
        %v746 = vunpack.c.l.b16 %v730
        %v747 = vpack.c.b16 %v740, %v739
        %v748 = vpack.c.b16 %v742, %v741
        %v749 = vpack.c.b16 %v744, %v743
        %v750 = vpack.c.b16 %v746, %v745
        %755 = vmatprep.subr.bf16.mxu0 0
        %756 = vmatpush1.bf16.msra.mxu0 %v512
        %757 = vmatprep.subr.bf16.mxu0 0
        %758 = vmatpush1.bf16.msra.mxu0 %v511
        %759 = vmatprep.subr.bf16.mxu0 0
        %760 = vmatpush1.bf16.msra.mxu0 %v510
        %761 = vmatprep.subr.bf16.mxu0 0
        %762 = vmatpush1.bf16.msra.mxu0 %v509
        %763 = vmatprep.subr.bf16.mxu0 0
        %764 = vmatpush1.bf16.msra.mxu0 %v508
        %765 = vmatprep.subr.bf16.mxu0 0
        %766 = vmatpush1.bf16.msra.mxu0 %v507
        %767 = vmatprep.subr.bf16.mxu0 0
        %768 = vmatpush1.bf16.msra.mxu0 %v506
        %769 = vmatprep.subr.bf16.mxu0 0
        %770 = vmatpush1.bf16.msra.mxu0 %v505
        %771 = vmatprep.subr.bf16.mxu0 0
        %772 = vmatpush2.bf16.msra.mxu0 0
        %773 = vmatprep.subr.bf16.mxu0 0
        %774 = vmatpush2.bf16.msra.mxu0 0
        %775 = vmatprep.subr.bf16.mxu0 0
        %776 = vmatpush2.bf16.msra.mxu0 0
        %777 = vmatprep.subr.bf16.mxu0 0
        %778 = vmatpush2.bf16.msra.mxu0 0
        %779 = vmatprep.subr.bf16.mxu0 0
        %780 = vmatpush2.bf16.msra.mxu0 0
        %781 = vmatprep.subr.bf16.mxu0 0
        %782 = vmatpush2.bf16.msra.mxu0 0
        %783 = vmatprep.subr.bf16.mxu0 0
        %784 = vmatpush2.bf16.msra.mxu0 0
        %785 = vmatprep.subr.bf16.mxu0 0
        %786 = vmatpush2.bf16.msra.mxu0 0
        %787 = vmatprep.mubr.bf16.mxu0 0
        %788 = vmatmul.mubr.bf16.gmra.mxu0 %v747
        %v789 = vpop.f32.mrf.mxu0
        %v790 = vadd.f32 0.0, %v789
        %v791 = vpop.f32.mrf.mxu0
        %v792 = vpop.f32.mrf.mxu0
        %v793 = vadd.f32 0.0, %v792
        %v794 = vpop.f32.mrf.mxu0
        %795 = vmatprep.mubr.bf16.mxu0 0
        %796 = vmatmul.mubr.bf16.gmra.mxu0 %v748
        %v797 = vpop.f32.mrf.mxu0
        %v798 = vadd.f32 0.0, %v797
        %v799 = vpop.f32.mrf.mxu0
        %v800 = vpop.f32.mrf.mxu0
        %v801 = vadd.f32 0.0, %v800
        %v802 = vpop.f32.mrf.mxu0
        %803 = vmatprep.mubr.bf16.mxu0 0
        %804 = vmatmul.mubr.bf16.gmra.mxu0 %v749
        %v805 = vpop.f32.mrf.mxu0
        %v806 = vadd.f32 0.0, %v805
        %v807 = vpop.f32.mrf.mxu0
        %v808 = vpop.f32.mrf.mxu0
        %v809 = vadd.f32 0.0, %v808
        %v810 = vpop.f32.mrf.mxu0
        %811 = vmatprep.mubr.bf16.mxu0 0
        %812 = vmatmul.mubr.bf16.gmra.mxu0 %v750
        %v813 = vpop.f32.mrf.mxu0
        %v814 = vadd.f32 0.0, %v813
        %v815 = vpop.f32.mrf.mxu0
        %v816 = vpop.f32.mrf.mxu0
        %v817 = vadd.f32 0.0, %v816
        %v818 = vpop.f32.mrf.mxu0
        %819 = vdwg.mxu0
        %v820 = vadd.f32 %v790, %v589
        %v821 = vadd.f32 %v793, %v594
        %v822 = vadd.f32 %v798, %v599
        %v823 = vadd.f32 %v801, %v604
        %v824 = vadd.f32 %v806, %v609
        %v825 = vadd.f32 %v809, %v614
        %v826 = vadd.f32 %v814, %v619
        %v827 = vadd.f32 %v817, %v624
        %v828 = vld [vmem:[#allocation2 + $0x1] sm:$0x1]
        %v829 = vmax.f32 %v820, %v824
        %v830 = vmax.f32 %v821, %v825
        %v831 = vmax.f32 %v822, %v826
        %v832 = vmax.f32 %v823, %v827
        %v833 = vmax.f32 %v829, %v830
        %v834 = vmax.f32 %v831, %v832
        %v835 = vmax.f32 %v833, %v834
        %v836 = vrot.slane %v835, 4
        %v837 = vmax.f32 %v835, %v836
        %v838 = vrot.slane %v837, 2
        %v839 = vmax.f32 %v837, %v838
        %v840 = vrot.slane %v839, 1
        %v841 = vmax.f32 %v839, %v840
        %v842 = vmax.f32 %v828, %v841
        %v843 = vsub.f32 %v828, %v842
        %v844 = vmul.f32 %v843, 1.442695
        %v845 = vpow.pop %v844
        %v846 = vlaneseq
        %v847 = vshrl.u32 %v846, 7
        %v848 = vsub.s32 0, %v847
        %v849 = vrot.slane %v842, %v848
        %v850 = vsub.f32 %v820, %v849
        %v851 = vsub.f32 %v821, %v849
        %v852 = vsub.f32 %v822, %v849
        %v853 = vsub.f32 %v823, %v849
        %v854 = vsub.f32 %v824, %v849
        %v855 = vsub.f32 %v825, %v849
        %v856 = vsub.f32 %v826, %v849
        %v857 = vsub.f32 %v827, %v849
        %v858 = vmul.f32 %v850, 1.442695
        %v859 = vpow.pop %v858
        %v860 = vmul.f32 %v851, 1.442695
        %v861 = vpow.pop %v860
        %v862 = vmul.f32 %v852, 1.442695
        %v863 = vpow.pop %v862
        %v864 = vmul.f32 %v853, 1.442695
        %v865 = vpow.pop %v864
        %v866 = vmul.f32 %v854, 1.442695
        %v867 = vpow.pop %v866
        %v868 = vmul.f32 %v855, 1.442695
        %v869 = vpow.pop %v868
        %v870 = vmul.f32 %v856, 1.442695
        %v871 = vpow.pop %v870
        %v872 = vmul.f32 %v857, 1.442695
        %v873 = vpow.pop %v872
        %v874 = vld [vmem:[#allocation3 + $0x1] sm:$0x1]
        %v875 = vmul.f32 %v845, %v874
        %v876 = vadd.f32 %v859, %v861
        %v877 = vadd.f32 %v876, %v863
        %v878 = vadd.f32 %v877, %v865
        %v879 = vadd.f32 %v878, %v867
        %v880 = vadd.f32 %v879, %v869
        %v881 = vadd.f32 %v880, %v871
        %v882 = vadd.f32 %v881, %v873
        %v883 = vrot.slane %v882, 4
        %v884 = vadd.f32 %v882, %v883
        %v885 = vrot.slane %v884, 2
        %v886 = vadd.f32 %v884, %v885
        %v887 = vrot.slane %v886, 1
        %v888 = vadd.f32 %v886, %v887
        %v889 = vadd.f32 %v875, %v888
        %890 = vst [vmem:[#allocation3 + $0x1] sm:$0x1] %v889
        %v891 = vld [vmem:[#allocation4 + $0x1] sm:$0x1]
        %v892 = vmul.f32 %v845, %v891
        %v893 = vmul.f32 %v859, %v790
        %v894 = vmul.f32 %v861, %v793
        %v895 = vmul.f32 %v863, %v798
        %v896 = vmul.f32 %v865, %v801
        %v897 = vmul.f32 %v867, %v806
        %v898 = vmul.f32 %v869, %v809
        %v899 = vmul.f32 %v871, %v814
        %v900 = vmul.f32 %v873, %v817
        %v901 = vadd.f32 %v893, %v894
        %v902 = vadd.f32 %v901, %v895
        %v903 = vadd.f32 %v902, %v896
        %v904 = vadd.f32 %v903, %v897
        %v905 = vadd.f32 %v904, %v898
        %v906 = vadd.f32 %v905, %v899
        %v907 = vadd.f32 %v906, %v900
        %v908 = vrot.slane %v907, 4
        %v909 = vadd.f32 %v907, %v908
        %v910 = vrot.slane %v909, 2
        %v911 = vadd.f32 %v909, %v910
        %v912 = vrot.slane %v911, 1
        %v913 = vadd.f32 %v911, %v912
        %v914 = vadd.f32 %v892, %v913
        %915 = vst [vmem:[#allocation4 + $0x1] sm:$0x1] %v914
        %916 = vst [vmem:[#allocation2 + $0x1] sm:$0x1] %v842
        %p917 = scmp.eq.s32.totalorder %s34, 3
        // Predicated region
        $region49: #{tpu_custom_call.1} parent=39 // pred_check
          %p918 = pneg %p917
        $region50: #{tpu_custom_call.1} parent=39 // pred_check_branch
          %920 = sbr.rel (%p918) target = $region52
        $region51: #{tpu_custom_call.1} parent=39 // pred_region
          %v921 = vld [vmem:[#allocation3] sm:$0x3]
          %v922 = vadd.f32 %v921, 1e-09
          %v923 = vrcp.pop %v922
          %v924 = vld [vmem:[#allocation4] sm:$0x3]
          %v925 = vmul.f32 %v924, %v923
          %v926 = vld [vmem:[%s406] sm:$0x1]
          %v928 = vlaneseq
          %v929 = vshrl.u32 %v928, 7
          %v930 = vsub.s32 0, %v929
          %v931 = vrot.slane %v926, %v930
          %v933 = vadd.f32 %v925, %v931
          %934 = vst [vmem:[%s372] sm:$0x1] %v933
          %935 = vst [vmem:[%s378 - $0x1] sm:$0x2] %v933
        $region52: #{tpu_custom_call.1} parent=39 // pred_fallthru
          _
        %s936 = sand.u32 %s190, 1
        %s937 = scalar_lea.sflag [#allocation7], %s936
        %s938 = sand.u32 %s190, 1
        %s939 = scalar_lea.vmem [#allocation8], %s938
        %s940 = sand.u32 %s218, 1
        %s941 = scalar_lea.sflag [#allocation10], %s940
        %s942 = sand.u32 %s218, 1
        %s943 = scalar_lea.vmem [#allocation9], %s942
        // Predicated region
        $region53: #{tpu_custom_call.1} parent=39 // pred_check
          %p944 = pneg %p200
        $region54: #{tpu_custom_call.1} parent=39 // pred_check_branch
          %946 = sbr.rel (%p944) target = $region56
        $region55: #{tpu_custom_call.1} parent=39 // pred_region
          %s948 = ssub.s32 16, 16
          %949 = vsyncadd %s937, %s948
          %s950 = smul.addr %s32, 3
          %s951 = sadd.s32 %s33, %s950
          %s952 = smul.addr %s951, 16
          %s953 = scalar_lea.hbm %s5, %s952
          %s955 = sshll.u32 %s939, 4
          %s956 = int_to_ptr.vmem [resolvable:$true] %s955
          %958 = dma.vmem_to_hbm [thread:$0]  %s956, 16, %s953, %s937
        $region56: #{tpu_custom_call.1} parent=39 // pred_fallthru
          _
        // Predicated region
        $region57: #{tpu_custom_call.1} parent=39 // pred_check
          %p959 = pneg %p228
        $region58: #{tpu_custom_call.1} parent=39 // pred_check_branch
          %961 = sbr.rel (%p959) target = $region60
        $region59: #{tpu_custom_call.1} parent=39 // pred_region
          %s963 = ssub.s32 16, 16
          %964 = vsyncadd %s941, %s963
          %s965 = smul.addr %s32, 3
          %s966 = sadd.s32 %s33, %s965
          %s967 = smul.addr %s966, 16
          %s968 = scalar_lea.hbm %s6, %s967
          %s970 = sshll.u32 %s943, 4
          %s971 = int_to_ptr.vmem [resolvable:$true] %s970
          %973 = dma.vmem_to_hbm [thread:$0]  %s971, 16, %s968, %s941
        $region60: #{tpu_custom_call.1} parent=39 // pred_fallthru
          _
      $region40: #{tpu_custom_call.1} parent=5 // pred_fallthru
        _
      %p974 = scmp.le.s32.totalorder 2, %s22
      // Predicated region
      $region61: #{tpu_custom_call.1} parent=5 // pred_check
        %p975 = pneg %p974
      $region62: #{tpu_custom_call.1} parent=5 // pred_check_branch
        %977 = sbr.rel (%p975) target = $region64
      $region63: #{tpu_custom_call.1} parent=5 // pred_region
        %s978 = ssub.s32 %s22, 2
        // Predicated region
        $region65: #{tpu_custom_call.1} parent=63 // pred_check
          %p979 = pneg %p206
        $region66: #{tpu_custom_call.1} parent=63 // pred_check_branch
          %981 = sbr.rel (%p979) target = $region68
        $region67: #{tpu_custom_call.1} parent=63 // pred_region
          %s982 = sand.u32 %s191, 1
          %s983 = scalar_lea.sflag [#allocation7], %s982
          %s984 = sand.u32 %s191, 1
          %s985 = scalar_lea.vmem [#allocation8], %s984
          %986 = dma.done %s983, 16
        $region68: #{tpu_custom_call.1} parent=63 // pred_fallthru
          _
        // Predicated region
        $region69: #{tpu_custom_call.1} parent=63 // pred_check
          %p987 = pneg %p234
        $region70: #{tpu_custom_call.1} parent=63 // pred_check_branch
          %989 = sbr.rel (%p987) target = $region72
        $region71: #{tpu_custom_call.1} parent=63 // pred_region
          %s990 = sand.u32 %s219, 1
          %s991 = scalar_lea.sflag [#allocation10], %s990
          %s992 = sand.u32 %s219, 1
          %s993 = scalar_lea.vmem [#allocation9], %s992
          %994 = dma.done %s991, 16
        $region72: #{tpu_custom_call.1} parent=63 // pred_fallthru
          _
      $region64: #{tpu_custom_call.1} parent=5 // pred_fallthru
        _
    $region6: #{tpu_custom_call.1} parent=1 // loop_footer
      %s26 = sadd.s32 1, %s22
    $region7: #{tpu_custom_call.1} parent=1 // loop_footer_branch
      %21 = sbr.rel target = $region3
    $region8: #{tpu_custom_call.1} parent=1 // loop_exit
      _
    %995 = vsyncpa [#allocation6], 1
    %s996 = scalar_lea.sflag [#allocation6], 1
    %997 = vsyncpa %s996, 1
    %998 = vsyncpa [#allocation7], 1
    %s999 = scalar_lea.sflag [#allocation7], 1
    %1000 = vsyncpa %s999, 1
    %1001 = vsyncpa [#allocation10], 1
    %s1002 = scalar_lea.sflag [#allocation10], 1
    %1003 = vsyncpa %s1002, 1

</llo_original>
